<compile_context>
chip_gen: v7x
topology: tpu7x:2x2x1
jax: 0.10.0
libtpu: 0.0.40
codegen_flags: <defaults>
</compile_context>

<pallas_src>
import functools

import jax
import jax.numpy as jnp
from jax import lax
from jax.experimental import pallas as pl
from jax.experimental.pallas import tpu as pltpu

_LANES = 128
_SUBLANES = 8


def _round_up(x, m):
    return ((x + m - 1) // m) * m


def _pow_static(x, gamma):
    """Static-exponent power: integer gamma avoids exp/log on the EUP."""
    g = float(gamma)
    if g == round(g) and g >= 0:
        n = int(round(g))
        if n == 0:
            return jnp.ones_like(x)
        if n == 1:
            return x
        return lax.integer_pow(x, n)  # gamma=2.0 -> x*x
    return jnp.power(x, g)


def _focal_loss_kernel(pred_ref, true_ref, bce_out_ref, fw_out_ref,
                       acc_bce_ref, acc_fw_ref, *, gamma, hard_labels):
    i = pl.program_id(1)

    @pl.when(i == 0)
    def _init():
        acc_bce_ref[...] = jnp.zeros_like(acc_bce_ref)
        acc_fw_ref[...] = jnp.zeros_like(acc_fw_ref)

    p = pred_ref[...].astype(jnp.float32)
    t = true_ref[...].astype(jnp.float32)

    if hard_labels:
        # Labels guaranteed 0/1: one log per element.
        bce = -jnp.maximum(jnp.log(jnp.where(t >= 0.5, p, 1.0 - p)), -100.0)
    else:
        # General (soft-label-safe) path, matches nn.BCELoss exactly.
        log_p = jnp.maximum(jnp.log(p), -100.0)
        log_1mp = jnp.maximum(jnp.log(1.0 - p), -100.0)
        bce = -(t * log_p + (1.0 - t) * log_1mp)

    one_minus_pt = 1.0 - (t * p + (1.0 - t) * (1.0 - p))
    focal_w = _pow_static(one_minus_pt, gamma)

    # Vector partial sums: pure VPU adds into (8,128) accumulators.
    tr = bce.shape[0]
    acc_bce_ref[...] += bce.reshape(tr // _SUBLANES, _SUBLANES, _LANES).sum(axis=0)
    acc_fw_ref[...] += focal_w.reshape(tr // _SUBLANES, _SUBLANES, _LANES).sum(axis=0)

    @pl.when(i == pl.num_programs(1) - 1)
    def _finalize():
        bce_out_ref[...] = acc_bce_ref[...]
        fw_out_ref[...] = acc_fw_ref[...]


def focal_loss(y_pred, y_true, alpha=0.25, gamma=2.0,
               tile_rows=1024, num_splits=2, hard_labels=False):
    """y_pred, y_true: same shape (e.g. NCHW), values in [0, 1]. Returns scalar f32."""
    assert y_pred.shape == y_true.shape
    total = y_pred.size

    pred = y_pred.reshape(-1)
    true = y_true.reshape(-1)

    # ---- sizing: lane-dense 2-D view, padded with neutral (p=1, t=1) elements ----
    rows_needed = -(-total // _LANES)
    # Clamp tile so tiny inputs don't get padded to a huge block.
    tile_rows = min(int(tile_rows),
                    max(_SUBLANES,
                        _round_up(-(-rows_needed // num_splits), _SUBLANES)))
    chunk_rows = num_splits * tile_rows
    rows_padded = _round_up(max(rows_needed, chunk_rows), chunk_rows)
    inner = rows_padded // chunk_rows

    pad = rows_padded * _LANES - total
    if pad:
        # p=1, t=1 contributes exactly 0 to both the BCE sum and the focal-weight sum.
        pred = jnp.concatenate([pred, jnp.ones((pad,), pred.dtype)])
        true = jnp.concatenate([true, jnp.ones((pad,), true.dtype)])

    pred2d = pred.reshape(rows_padded, _LANES)
    true2d = true.reshape(rows_padded, _LANES)

    kernel = functools.partial(
        _focal_loss_kernel, gamma=float(gamma), hard_labels=bool(hard_labels)
    )

    in_map = lambda c, i: (c * inner + i, 0)
    out_map = lambda c, i: (c, 0, 0)

    out_bce, out_fw = pl.pallas_call(
        kernel,
        out_shape=(
            jax.ShapeDtypeStruct((num_splits, _SUBLANES, _LANES), jnp.float32),
            jax.ShapeDtypeStruct((num_splits, _SUBLANES, _LANES), jnp.float32),
        ),
        grid_spec=pltpu.PrefetchScalarGridSpec(
            num_scalar_prefetch=0,
            grid=(num_splits, inner),
            in_specs=[
                pl.BlockSpec((tile_rows, _LANES), in_map),
                pl.BlockSpec((tile_rows, _LANES), in_map),
            ],
            out_specs=[
                pl.BlockSpec((None, _SUBLANES, _LANES), out_map),
                pl.BlockSpec((None, _SUBLANES, _LANES), out_map),
            ],
            scratch_shapes=[
                pltpu.VMEM((_SUBLANES, _LANES), jnp.float32),
                pltpu.VMEM((_SUBLANES, _LANES), jnp.float32),
            ],
        ),
        compiler_params=pltpu.CompilerParams(
            dimension_semantics=("parallel", "arbitrary"),
        ),
    )(pred2d, true2d)

    # Tiny final reduction + scalar math in the wrapper.
    inv_n = 1.0 / float(total)
    mean_bce = jnp.sum(out_bce) * inv_n
    mean_fw = jnp.sum(out_fw) * inv_n
    return float(alpha) * mean_fw * mean_bce


def _focal_loss_ref(y_pred, y_true, alpha=0.25, gamma=2.0):
    p = y_pred.astype(jnp.float32)
    t = y_true.astype(jnp.float32)
    bce = -(t * jnp.maximum(jnp.log(p), -100.0)
            + (1.0 - t) * jnp.maximum(jnp.log(1.0 - p), -100.0))
    bce_mean = jnp.mean(bce)
    p_t = t * p + (1.0 - t) * (1.0 - p)
    loss = alpha * (1.0 - p_t) ** gamma * bce_mean
    return jnp.mean(loss)


if __name__ == "__main__":
    key = jax.random.PRNGKey(0)
    k1, k2 = jax.random.split(key)

    B, C, H, W = 2, 4, 16, 16  # NCHW, 2048 elements
    # y_pred: probabilities in (0,1); y_true: hard 0/1 labels.
    y_pred = jax.nn.sigmoid(jax.random.normal(k1, (B, C, H, W), dtype=jnp.float32))
    y_true = jax.random.bernoulli(k2, 0.5, (B, C, H, W)).astype(jnp.float32)

    out = jax.block_until_ready(focal_loss(y_pred, y_true, alpha=0.25, gamma=2.0))
    ref = jax.block_until_ready(_focal_loss_ref(y_pred, y_true, alpha=0.25, gamma=2.0))

    assert jnp.allclose(out, ref, rtol=1e-5, atol=1e-6), (out, ref)
    print("KERNEL_OK")
</pallas_src>

<mosaic_0001>
module attributes {stable_mosaic.version = 11 : i64} {
  func.func @_focal_loss_kernel(%arg0: i32, %arg1: i32, %arg2: memref<8x128xf32, #tpu.memory_space<vmem>>, %arg3: memref<8x128xf32, #tpu.memory_space<vmem>>, %arg4: memref<1x8x128xf32, #tpu.memory_space<vmem>>, %arg5: memref<1x8x128xf32, #tpu.memory_space<vmem>>, %arg6: memref<8x128xf32, #tpu.memory_space<vmem>>, %arg7: memref<8x128xf32, #tpu.memory_space<vmem>>) attributes {dimension_semantics = [#tpu.dimension_semantics<parallel>, #tpu.dimension_semantics<arbitrary>], iteration_bounds = array<i64: 2, 1>, scalar_prefetch = 0 : i64, scratch_operands = 2 : i64, tpu.core_type = #tpu.core_type<tc>, window_params = [{transform_indices = @transform_0, window_bounds = array<i64: 8, 128>}, {transform_indices = @transform_1, window_bounds = array<i64: 8, 128>}, {transform_indices = @transform_2, window_bounds = array<i64: 1, 8, 128>}, {transform_indices = @transform_3, window_bounds = array<i64: 1, 8, 128>}]} {
    %c0_i32 = arith.constant 0 : i32
    %0 = arith.cmpi eq, %arg1, %c0_i32 : i32
    %1 = arith.extui %0 : i1 to i32
    %c0_i32_0 = arith.constant 0 : i32
    %2 = arith.cmpi ne, %1, %c0_i32_0 : i32
    scf.if %2 {
      %cst_23 = arith.constant 0.000000e+00 : f32
      %43 = vector.broadcast %cst_23 : f32 to vector<8x128xf32>
      %c0_24 = arith.constant 0 : index
      %c0_25 = arith.constant 0 : index
      %44 = vector.load %arg6[%c0_24, %c0_25] : memref<8x128xf32, #tpu.memory_space<vmem>>, vector<8x128xf32>
      tpu.vector_store %arg6[%c0_24, %c0_25], %43 {strides = array<i32>} : memref<8x128xf32, #tpu.memory_space<vmem>>, vector<8x128xf32>,
      %cst_26 = arith.constant 0.000000e+00 : f32
      %45 = vector.broadcast %cst_26 : f32 to vector<8x128xf32>
      %c0_27 = arith.constant 0 : index
      %c0_28 = arith.constant 0 : index
      %46 = vector.load %arg7[%c0_27, %c0_28] : memref<8x128xf32, #tpu.memory_space<vmem>>, vector<8x128xf32>
      tpu.vector_store %arg7[%c0_27, %c0_28], %45 {strides = array<i32>} : memref<8x128xf32, #tpu.memory_space<vmem>>, vector<8x128xf32>,
    } else {
    }
    %c0 = arith.constant 0 : index
    %c0_1 = arith.constant 0 : index
    %3 = vector.load %arg2[%c0, %c0_1] : memref<8x128xf32, #tpu.memory_space<vmem>>, vector<8x128xf32>
    %c0_2 = arith.constant 0 : index
    %c0_3 = arith.constant 0 : index
    %4 = vector.load %arg3[%c0_2, %c0_3] : memref<8x128xf32, #tpu.memory_space<vmem>>, vector<8x128xf32>
    %5 = math.log %3 : vector<8x128xf32>
    %cst = arith.constant -1.000000e+02 : f32
    %6 = vector.broadcast %cst : f32 to vector<8x128xf32>
    %7 = arith.maximumf %5, %6 : vector<8x128xf32>
    %cst_4 = arith.constant 1.000000e+00 : f32
    %8 = vector.broadcast %cst_4 : f32 to vector<8x128xf32>
    %9 = arith.subf %8, %3 : vector<8x128xf32>
    %10 = math.log %9 : vector<8x128xf32>
    %cst_5 = arith.constant -1.000000e+02 : f32
    %11 = vector.broadcast %cst_5 : f32 to vector<8x128xf32>
    %12 = arith.maximumf %10, %11 : vector<8x128xf32>
    %13 = arith.mulf %4, %7 : vector<8x128xf32>
    %cst_6 = arith.constant 1.000000e+00 : f32
    %14 = vector.broadcast %cst_6 : f32 to vector<8x128xf32>
    %15 = arith.subf %14, %4 : vector<8x128xf32>
    %16 = arith.mulf %15, %12 : vector<8x128xf32>
    %17 = arith.addf %13, %16 : vector<8x128xf32>
    %cst_7 = arith.constant 0.000000e+00 : f32
    %18 = vector.broadcast %cst_7 : f32 to vector<8x128xf32>
    %19 = arith.subf %18, %17 : vector<8x128xf32>
    %20 = arith.mulf %4, %3 : vector<8x128xf32>
    %cst_8 = arith.constant 1.000000e+00 : f32
    %21 = vector.broadcast %cst_8 : f32 to vector<8x128xf32>
    %22 = arith.subf %21, %4 : vector<8x128xf32>
    %cst_9 = arith.constant 1.000000e+00 : f32
    %23 = vector.broadcast %cst_9 : f32 to vector<8x128xf32>
    %24 = arith.subf %23, %3 : vector<8x128xf32>
    %25 = arith.mulf %22, %24 : vector<8x128xf32>
    %26 = arith.addf %20, %25 : vector<8x128xf32>
    %cst_10 = arith.constant 1.000000e+00 : f32
    %27 = vector.broadcast %cst_10 : f32 to vector<8x128xf32>
    %28 = arith.subf %27, %26 : vector<8x128xf32>
    %29 = arith.mulf %28, %28 : vector<8x128xf32>
    %c0_11 = arith.constant 0 : index
    %c0_12 = arith.constant 0 : index
    %30 = vector.load %arg6[%c0_11, %c0_12] : memref<8x128xf32, #tpu.memory_space<vmem>>, vector<8x128xf32>
    %31 = vector.shape_cast %19 : vector<8x128xf32> to vector<1x8x128xf32>
    %cst_13 = arith.constant dense<0.000000e+00> : vector<8x128xf32>
    %32 = vector.multi_reduction <add>, %31, %cst_13 [0] : vector<1x8x128xf32> to vector<8x128xf32>
    %33 = arith.addf %30, %32 : vector<8x128xf32>
    %c0_14 = arith.constant 0 : index
    %c0_15 = arith.constant 0 : index
    %34 = vector.load %arg6[%c0_14, %c0_15] : memref<8x128xf32, #tpu.memory_space<vmem>>, vector<8x128xf32>
    tpu.vector_store %arg6[%c0_14, %c0_15], %33 {strides = array<i32>} : memref<8x128xf32, #tpu.memory_space<vmem>>, vector<8x128xf32>,
    %c0_16 = arith.constant 0 : index
    %c0_17 = arith.constant 0 : index
    %35 = vector.load %arg7[%c0_16, %c0_17] : memref<8x128xf32, #tpu.memory_space<vmem>>, vector<8x128xf32>
    %36 = vector.shape_cast %29 : vector<8x128xf32> to vector<1x8x128xf32>
    %cst_18 = arith.constant dense<0.000000e+00> : vector<8x128xf32>
    %37 = vector.multi_reduction <add>, %36, %cst_18 [0] : vector<1x8x128xf32> to vector<8x128xf32>
    %38 = arith.addf %35, %37 : vector<8x128xf32>
    %c0_19 = arith.constant 0 : index
    %c0_20 = arith.constant 0 : index
    %39 = vector.load %arg7[%c0_19, %c0_20] : memref<8x128xf32, #tpu.memory_space<vmem>>, vector<8x128xf32>
    tpu.vector_store %arg7[%c0_19, %c0_20], %38 {strides = array<i32>} : memref<8x128xf32, #tpu.memory_space<vmem>>, vector<8x128xf32>,
    %c0_i32_21 = arith.constant 0 : i32
    %40 = arith.cmpi eq, %arg1, %c0_i32_21 : i32
    %41 = arith.extui %40 : i1 to i32
    %c0_i32_22 = arith.constant 0 : i32
    %42 = arith.cmpi ne, %41, %c0_i32_22 : i32
    scf.if %42 {
      %c0_23 = arith.constant 0 : index
      %c0_24 = arith.constant 0 : index
      %43 = vector.load %arg6[%c0_23, %c0_24] : memref<8x128xf32, #tpu.memory_space<vmem>>, vector<8x128xf32>
      %c0_25 = arith.constant 0 : index
      %c0_26 = arith.constant 0 : index
      %c0_27 = arith.constant 0 : index
      %44 = vector.load %arg4[%c0_25, %c0_26, %c0_27] : memref<1x8x128xf32, #tpu.memory_space<vmem>>, vector<1x8x128xf32>
      %45 = vector.shape_cast %44 : vector<1x8x128xf32> to vector<8x128xf32>
      %46 = vector.shape_cast %43 : vector<8x128xf32> to vector<1x8x128xf32>
      tpu.vector_store %arg4[%c0_25, %c0_26, %c0_27], %46 {strides = array<i32>} : memref<1x8x128xf32, #tpu.memory_space<vmem>>, vector<1x8x128xf32>,
      %c0_28 = arith.constant 0 : index
      %c0_29 = arith.constant 0 : index
      %47 = vector.load %arg7[%c0_28, %c0_29] : memref<8x128xf32, #tpu.memory_space<vmem>>, vector<8x128xf32>
      %c0_30 = arith.constant 0 : index
      %c0_31 = arith.constant 0 : index
      %c0_32 = arith.constant 0 : index
      %48 = vector.load %arg5[%c0_30, %c0_31, %c0_32] : memref<1x8x128xf32, #tpu.memory_space<vmem>>, vector<1x8x128xf32>
      %49 = vector.shape_cast %48 : vector<1x8x128xf32> to vector<8x128xf32>
      %50 = vector.shape_cast %47 : vector<8x128xf32> to vector<1x8x128xf32>
      tpu.vector_store %arg5[%c0_30, %c0_31, %c0_32], %50 {strides = array<i32>} : memref<1x8x128xf32, #tpu.memory_space<vmem>>, vector<1x8x128xf32>,
    } else {
    }
    return
  }
  func.func @transform_0(%arg0: i32, %arg1: i32) -> (i32, i32) {
    %c1_i32 = arith.constant 1 : i32
    %0 = arith.muli %arg0, %c1_i32 : i32
    %1 = arith.addi %0, %arg1 : i32
    %c0_i32 = arith.constant 0 : i32
    %c0_i32_0 = arith.constant 0 : i32
    return %1, %c0_i32 : i32, i32
  }
  func.func @transform_1(%arg0: i32, %arg1: i32) -> (i32, i32) {
    %c1_i32 = arith.constant 1 : i32
    %0 = arith.muli %arg0, %c1_i32 : i32
    %1 = arith.addi %0, %arg1 : i32
    %c0_i32 = arith.constant 0 : i32
    %c0_i32_0 = arith.constant 0 : i32
    return %1, %c0_i32 : i32, i32
  }
  func.func @transform_2(%arg0: i32, %arg1: i32) -> (i32, i32, i32) {
    %c0_i32 = arith.constant 0 : i32
    %c0_i32_0 = arith.constant 0 : i32
    %c0_i32_1 = arith.constant 0 : i32
    return %arg0, %c0_i32, %c0_i32_0 : i32, i32, i32
  }
  func.func @transform_3(%arg0: i32, %arg1: i32) -> (i32, i32, i32) {
    %c0_i32 = arith.constant 0 : i32
    %c0_i32_0 = arith.constant 0 : i32
    %c0_i32_1 = arith.constant 0 : i32
    return %arg0, %c0_i32, %c0_i32_0 : i32, i32, i32
  }
}

</mosaic_0001>

<llo_original>
// kernel: tpu_custom_call.1
$region0: #{tpu_custom_call.1}
  #allocation0 [shape = 'u32[]', space=smem, size = 0x4, offset = 0x4, fixed_abs, tag = 'smem constant byte address 0x4 - core index']
  #allocation1 [shape = 'u32[144,128]{1,0:T(1,128)}', space=vmem, size = 0x12000, scoped, tag = 'internal scratch']
  #allocation2 [shape = 'f32[8,128]{1,0:T(8,128)}', space=vmem, size = 0x1000, scoped, tag = 'scratch operand']
  #allocation3 [shape = 'f32[8,128]{1,0:T(8,128)}', space=vmem, size = 0x1000, scoped, tag = 'scratch operand']
  %s0 = inlined_call_operand.hbm [shape: f32[16,128], index: 0, kind: input, shape index: {}]
  %s1 = inlined_call_operand.hbm [shape: f32[16,128], index: 1, kind: input, shape index: {}]
  %s2 = inlined_call_operand.hbm [shape: f32[2,8,128], index: 2, kind: output, shape index: {0}]
  %s3 = inlined_call_operand.hbm [shape: f32[2,8,128], index: 3, kind: output, shape index: {1}]
  %4 = xla_tuple %s2, %s3
  %s5 = sld [smem:[#allocation0]]
  $region65: #{tpu_custom_call.1} parent=0
    _
  %s7 = ssub.s32 1, %s5
  %s8 = scalar_select 0, %s7, %s5
  $region1: #{tpu_custom_call.1} parent=0
    #allocation4 [shape = 'u8[8192]{0}', space=vmem, size = 0x2000, scoped, tag = 'input window, operand 0']
    #allocation5 [shape = 's32[2]{0}', space=sflag, size = 0x8, scoped, tag = 'scoped memory for tpu_custom_call.1']
    #allocation6 [shape = 's32[2]{0}', space=sflag, size = 0x8, scoped, tag = 'scoped memory for tpu_custom_call.1']
    #allocation7 [shape = 'u8[8192]{0}', space=vmem, size = 0x2000, scoped, tag = 'input window, operand 1']
    #allocation8 [shape = 's32[2]{0}', space=sflag, size = 0x8, scoped, tag = 'scoped memory for tpu_custom_call.1']
    #allocation9 [shape = 'u8[8192]{0}', space=vmem, size = 0x2000, scoped, tag = 'output window, operand 0']
    #allocation10 [shape = 'u8[8192]{0}', space=vmem, size = 0x2000, scoped, tag = 'output window, operand 1']
    #allocation11 [shape = 's32[2]{0}', space=sflag, size = 0x8, scoped, tag = 'scoped memory for tpu_custom_call.1']
    %9 = vsyncpa [#allocation5], 0
    %s10 = scalar_lea.sflag [#allocation5], 1
    %11 = vsyncpa %s10, 0
    %12 = vsyncpa [#allocation8], 0
    %s13 = scalar_lea.sflag [#allocation8], 1
    %14 = vsyncpa %s13, 0
    %15 = vsyncpa [#allocation6], 0
    %s16 = scalar_lea.sflag [#allocation6], 1
    %17 = vsyncpa %s16, 0
    %18 = vsyncpa [#allocation11], 0
    %s19 = scalar_lea.sflag [#allocation11], 1
    %20 = vsyncpa %s19, 0
    loop: start=0, step=1, limit=4
    $region2: #{tpu_custom_call.1} parent=1 // loop_pre_header
      _
    $region3: #{tpu_custom_call.1} parent=1 // loop_header
      %s22 = sphi 0, %s26
      %p23 = scmp.ge.s32.totalorder %s22, 4
      %s29 = sphi 0, %s41
      %s30 = sphi 0, %s37
      %s31 = sphi 0, %s29
      %s32 = sphi 0, %s30
      %s33 = sphi 0, %s31
      %s34 = sphi 0, %s32
      %s46 = sphi 0, %s48
      %s49 = sphi 0, %s46
      %s50 = sphi 0, %s49
      %s66 = sphi 0, %s50
      %s74 = sphi 0, %s76
      %s77 = sphi 0, %s74
      %s78 = sphi 0, %s77
      %s94 = sphi 0, %s78
      %s100 = sphi 0, %s102
      %s103 = sphi 0, %s100
      %s104 = sphi 0, %s103
      %s120 = sphi 0, %s104
      %s126 = sphi 0, %s128
      %s129 = sphi 0, %s126
      %s130 = sphi 0, %s129
      %s146 = sphi 0, %s130
    $region4: #{tpu_custom_call.1} parent=1 // loop_header_branch
      %25 = sbr.rel (%p23) target = $region8
    $region5: #{tpu_custom_call.1} parent=1 // loop_body
      %s27 = ssub.s32 %s22, 1
      %s28 = ssub.s32 %s22, 2
      %s35 = sadd.s32 1, %s30
      %p36 = scmp.ge.s32.totalorder %s35, 1
      %s37 = scalar_select %p36, 0, %s35
      %s38 = sadd.s32 1, %s29
      %s39 = scalar_select %p36, %s38, %s29
      %p40 = scmp.ge.s32.totalorder %s39, 2
      %s41 = scalar_select %p40, 0, %s39
      %s42 = sadd.s32 %s29, %s30
      %s43 = sadd.s32 %s41, %s37
      %s44 = ssub.s32 %s42, %s43
      %p45 = scmp.eq.s32.totalorder %s44, 0
      %s47 = sadd.s32 %s46, 1
      %s48 = scalar_select %p45, %s46, %s47
      %p51 = pneg %p45
      %p52 = scmp.eq.s32.totalorder %s22, 1
      %p53 = por %p51, %p52
      %p54 = scmp.ne.s32.totalorder %s46, %s49
      %p55 = scmp.eq.s32.totalorder %s22, 0
      %p56 = por %p54, %p55
      %p57 = scmp.ne.s32.totalorder %s46, %s49
      %p58 = scmp.eq.s32.totalorder %s27, 1
      %p59 = por %p57, %p58
      %p60 = scmp.ne.s32.totalorder %s49, %s50
      %p61 = scmp.eq.s32.totalorder %s27, 0
      %p62 = por %p60, %p61
      %p63 = scmp.ne.s32.totalorder %s49, %s50
      %p64 = scmp.eq.s32.totalorder %s28, 1
      %p65 = por %p63, %p64
      %p67 = scmp.ne.s32.totalorder %s50, %s66
      %p68 = scmp.eq.s32.totalorder %s28, 0
      %p69 = por %p67, %p68
      %s70 = sadd.s32 %s29, %s30
      %s71 = sadd.s32 %s41, %s37
      %s72 = ssub.s32 %s70, %s71
      %p73 = scmp.eq.s32.totalorder %s72, 0
      %s75 = sadd.s32 %s74, 1
      %s76 = scalar_select %p73, %s74, %s75
      %p79 = pneg %p73
      %p80 = scmp.eq.s32.totalorder %s22, 1
      %p81 = por %p79, %p80
      %p82 = scmp.ne.s32.totalorder %s74, %s77
      %p83 = scmp.eq.s32.totalorder %s22, 0
      %p84 = por %p82, %p83
      %p85 = scmp.ne.s32.totalorder %s74, %s77
      %p86 = scmp.eq.s32.totalorder %s27, 1
      %p87 = por %p85, %p86
      %p88 = scmp.ne.s32.totalorder %s77, %s78
      %p89 = scmp.eq.s32.totalorder %s27, 0
      %p90 = por %p88, %p89
      %p91 = scmp.ne.s32.totalorder %s77, %s78
      %p92 = scmp.eq.s32.totalorder %s28, 1
      %p93 = por %p91, %p92
      %p95 = scmp.ne.s32.totalorder %s78, %s94
      %p96 = scmp.eq.s32.totalorder %s28, 0
      %p97 = por %p95, %p96
      %s98 = ssub.s32 %s29, %s41
      %p99 = scmp.eq.s32.totalorder %s98, 0
      %s101 = sadd.s32 %s100, 1
      %s102 = scalar_select %p99, %s100, %s101
      %p105 = pneg %p99
      %p106 = scmp.eq.s32.totalorder %s22, 1
      %p107 = por %p105, %p106
      %p108 = scmp.ne.s32.totalorder %s100, %s103
      %p109 = scmp.eq.s32.totalorder %s22, 0
      %p110 = por %p108, %p109
      %p111 = scmp.ne.s32.totalorder %s100, %s103
      %p112 = scmp.eq.s32.totalorder %s27, 1
      %p113 = por %p111, %p112
      %p114 = scmp.ne.s32.totalorder %s103, %s104
      %p115 = scmp.eq.s32.totalorder %s27, 0
      %p116 = por %p114, %p115
      %p117 = scmp.ne.s32.totalorder %s103, %s104
      %p118 = scmp.eq.s32.totalorder %s28, 1
      %p119 = por %p117, %p118
      %p121 = scmp.ne.s32.totalorder %s104, %s120
      %p122 = scmp.eq.s32.totalorder %s28, 0
      %p123 = por %p121, %p122
      %s124 = ssub.s32 %s29, %s41
      %p125 = scmp.eq.s32.totalorder %s124, 0
      %s127 = sadd.s32 %s126, 1
      %s128 = scalar_select %p125, %s126, %s127
      %p131 = pneg %p125
      %p132 = scmp.eq.s32.totalorder %s22, 1
      %p133 = por %p131, %p132
      %p134 = scmp.ne.s32.totalorder %s126, %s129
      %p135 = scmp.eq.s32.totalorder %s22, 0
      %p136 = por %p134, %p135
      %p137 = scmp.ne.s32.totalorder %s126, %s129
      %p138 = scmp.eq.s32.totalorder %s27, 1
      %p139 = por %p137, %p138
      %p140 = scmp.ne.s32.totalorder %s129, %s130
      %p141 = scmp.eq.s32.totalorder %s27, 0
      %p142 = por %p140, %p141
      %p143 = scmp.ne.s32.totalorder %s129, %s130
      %p144 = scmp.eq.s32.totalorder %s28, 1
      %p145 = por %p143, %p144
      %p147 = scmp.ne.s32.totalorder %s130, %s146
      %p148 = scmp.eq.s32.totalorder %s28, 0
      %p149 = por %p147, %p148
      %p150 = scmp.le.s32.totalorder 1, %s22
      %p151 = scmp.lt.s32.totalorder %s22, 3
      %p152 = pnand %p150, %p151
      %p153 = pneg %p152
      // Predicated region
      $region9: #{tpu_custom_call.1} parent=5 // pred_check
        _
      $region10: #{tpu_custom_call.1} parent=5 // pred_check_branch
        %155 = sbr.rel (%p152) target = $region12
      $region11: #{tpu_custom_call.1} parent=5 // pred_region
        %s156 = ssub.s32 %s22, 1
      $region12: #{tpu_custom_call.1} parent=5 // pred_fallthru
        _
      %p157 = scmp.lt.s32.totalorder %s22, 2
      // Predicated region
      $region13: #{tpu_custom_call.1} parent=5 // pred_check
        %p158 = pneg %p157
      $region14: #{tpu_custom_call.1} parent=5 // pred_check_branch
        %160 = sbr.rel (%p158) target = $region16
      $region15: #{tpu_custom_call.1} parent=5 // pred_region
        // Predicated region
        $region17: #{tpu_custom_call.1} parent=15 // pred_check
          %p161 = pneg %p56
        $region18: #{tpu_custom_call.1} parent=15 // pred_check_branch
          %163 = sbr.rel (%p161) target = $region20
        $region19: #{tpu_custom_call.1} parent=15 // pred_region
          %s164 = sand.u32 %s46, 1
          %s165 = scalar_lea.sflag [#allocation5], %s164
          %s166 = sand.u32 %s46, 1
          %s167 = smul.addr %s166, 8
          %s168 = scalar_lea.vmem [#allocation4], %s167
          %s169 = sadd.s32 %s29, %s30
          %s171 = ssub.s32 128, 128
          %172 = vsyncadd %s165, %s171
          %s173 = smul.addr %s169, 128
          %s174 = scalar_lea.hbm %s0, %s173
          %s176 = sshll.u32 %s168, 4
          %s177 = int_to_ptr.vmem [resolvable:$true] %s176
          %179 = dma.hbm_to_vmem [thread:$0]  %s174, 128, %s177, %s165
        $region20: #{tpu_custom_call.1} parent=15 // pred_fallthru
          _
        // Predicated region
        $region21: #{tpu_custom_call.1} parent=15 // pred_check
          %p180 = pneg %p84
        $region22: #{tpu_custom_call.1} parent=15 // pred_check_branch
          %182 = sbr.rel (%p180) target = $region24
        $region23: #{tpu_custom_call.1} parent=15 // pred_region
          %s183 = sand.u32 %s74, 1
          %s184 = scalar_lea.sflag [#allocation8], %s183
          %s185 = sand.u32 %s74, 1
          %s186 = smul.addr %s185, 8
          %s187 = scalar_lea.vmem [#allocation7], %s186
          %s188 = sadd.s32 %s29, %s30
          %s190 = ssub.s32 128, 128
          %191 = vsyncadd %s184, %s190
          %s192 = smul.addr %s188, 128
          %s193 = scalar_lea.hbm %s1, %s192
          %s195 = sshll.u32 %s187, 4
          %s196 = int_to_ptr.vmem [resolvable:$true] %s195
          %198 = dma.hbm_to_vmem [thread:$0]  %s193, 128, %s196, %s184
        $region24: #{tpu_custom_call.1} parent=15 // pred_fallthru
          _
      $region16: #{tpu_custom_call.1} parent=5 // pred_fallthru
        _
      %p199 = scmp.le.s32.totalorder 1, %s22
      %p200 = scmp.lt.s32.totalorder %s22, 3
      %p201 = pnand %p199, %p200
      %p202 = pneg %p201
      // Predicated region
      $region25: #{tpu_custom_call.1} parent=5 // pred_check
        _
      $region26: #{tpu_custom_call.1} parent=5 // pred_check_branch
        %204 = sbr.rel (%p201) target = $region28
      $region27: #{tpu_custom_call.1} parent=5 // pred_region
        %s205 = ssub.s32 %s22, 1
        %s206 = sand.u32 %s49, 1
        %s207 = scalar_lea.sflag [#allocation5], %s206
        %s208 = sand.u32 %s49, 1
        %s209 = smul.addr %s208, 8
        %s210 = scalar_lea.vmem [#allocation4], %s209
        // Predicated region
        $region29: #{tpu_custom_call.1} parent=27 // pred_check
          %p211 = pneg %p62
        $region30: #{tpu_custom_call.1} parent=27 // pred_check_branch
          %213 = sbr.rel (%p211) target = $region32
        $region31: #{tpu_custom_call.1} parent=27 // pred_region
          %214 = dma.done %s207, 128
        $region32: #{tpu_custom_call.1} parent=27 // pred_fallthru
          _
        %s215 = sand.u32 %s77, 1
        %s216 = scalar_lea.sflag [#allocation8], %s215
        %s217 = sand.u32 %s77, 1
        %s218 = smul.addr %s217, 8
        %s219 = scalar_lea.vmem [#allocation7], %s218
        // Predicated region
        $region33: #{tpu_custom_call.1} parent=27 // pred_check
          %p220 = pneg %p90
        $region34: #{tpu_custom_call.1} parent=27 // pred_check_branch
          %222 = sbr.rel (%p220) target = $region36
        $region35: #{tpu_custom_call.1} parent=27 // pred_region
          %223 = dma.done %s216, 128
        $region36: #{tpu_custom_call.1} parent=27 // pred_fallthru
          _
        %s224 = sand.u32 %s49, 1
        %s225 = scalar_lea.sflag [#allocation5], %s224
        %s226 = sand.u32 %s49, 1
        %s227 = smul.addr %s226, 8
        %s228 = scalar_lea.vmem [#allocation4], %s227
        %p229 = pneg %p62
        %p230 = pneg %p59
        %s231 = sand.u32 %s77, 1
        %s232 = scalar_lea.sflag [#allocation8], %s231
        %s233 = sand.u32 %s77, 1
        %s234 = smul.addr %s233, 8
        %s235 = scalar_lea.vmem [#allocation7], %s234
        %p236 = pneg %p90
        %p237 = pneg %p87
        %p238 = pneg %p116
        %p239 = pneg %p113
        %s240 = sand.u32 %s103, 1
        %s241 = scalar_lea.sflag [#allocation6], %s240
        %s242 = sand.u32 %s103, 1
        %s243 = smul.addr %s242, 8
        %s244 = scalar_lea.vmem [#allocation9], %s243
        %p245 = pneg %p142
        %p246 = pneg %p139
        %s247 = sand.u32 %s129, 1
        %s248 = scalar_lea.sflag [#allocation11], %s247
        %s249 = sand.u32 %s129, 1
        %s250 = smul.addr %s249, 8
        %s251 = scalar_lea.vmem [#allocation10], %s250
        %s252 = sadd.s32 %s31, %s32
        %s253 = sadd.s32 %s31, %s32
        %p254 = scmp.eq.s32.totalorder %s32, 0
        // Predicated region
        $region37: #{tpu_custom_call.1} parent=27 // pred_check
          %p255 = pneg %p254
        $region38: #{tpu_custom_call.1} parent=27 // pred_check_branch
          %257 = sbr.rel (%p255) target = $region40
        $region39: #{tpu_custom_call.1} parent=27 // pred_region
          %258 = vst [vmem:[#allocation2] sm:$0xff] 0.0
          %259 = vst [vmem:[#allocation3] sm:$0xff] 0.0
        $region40: #{tpu_custom_call.1} parent=27 // pred_fallthru
          _
        %v260 = vld [vmem:[%s210] sm:$0xff]
        %v261 = vld [vmem:[%s219] sm:$0xff]
        %v262 = vlog2.pop %v260
        %v263 = vmul.f32 %v262, 0.6931472
        %v264 = vmax.f32 %v263, -100.0
        %v265 = vsub.f32 1.0, %v260
        %v266 = vlog2.pop %v265
        %v267 = vmul.f32 %v266, 0.6931472
        %v268 = vmax.f32 %v267, -100.0
        %v269 = vmul.f32 %v261, %v264
        %v270 = vsub.f32 1.0, %v261
        %v271 = vmul.f32 %v270, %v268
        %v272 = vadd.f32 %v269, %v271
        %v273 = vsub.f32 0.0, %v272
        %v274 = vmul.f32 %v261, %v260
        %v275 = vmul.f32 %v270, %v265
        %v276 = vadd.f32 %v274, %v275
        %v277 = vsub.f32 1.0, %v276
        %v278 = vmul.f32 %v277, %v277
        %v279 = vld [vmem:[#allocation2] sm:$0xff]
        %v280 = vadd.f32 %v273, 0.0
        %v281 = vadd.f32 %v279, %v280
        %282 = vst [vmem:[#allocation2] sm:$0xff] %v281
        %v283 = vld [vmem:[#allocation3] sm:$0xff]
        %v284 = vadd.f32 %v278, 0.0
        %v285 = vadd.f32 %v283, %v284
        %286 = vst [vmem:[#allocation3] sm:$0xff] %v285
        // Predicated region
        $region41: #{tpu_custom_call.1} parent=27 // pred_check
          %p287 = pneg %p254
        $region42: #{tpu_custom_call.1} parent=27 // pred_check_branch
          %289 = sbr.rel (%p287) target = $region44
        $region43: #{tpu_custom_call.1} parent=27 // pred_region
          %v290 = vld [vmem:[#allocation2] sm:$0xff]
          %291 = vst [vmem:[%s244] sm:$0xff] %v290
          %v292 = vld [vmem:[#allocation3] sm:$0xff]
          %293 = vst [vmem:[%s251] sm:$0xff] %v292
        $region44: #{tpu_custom_call.1} parent=27 // pred_fallthru
          _
        %s294 = sand.u32 %s103, 1
        %s295 = scalar_lea.sflag [#allocation6], %s294
        %s296 = sand.u32 %s103, 1
        %s297 = smul.addr %s296, 8
        %s298 = scalar_lea.vmem [#allocation9], %s297
        %s299 = sand.u32 %s129, 1
        %s300 = scalar_lea.sflag [#allocation11], %s299
        %s301 = sand.u32 %s129, 1
        %s302 = smul.addr %s301, 8
        %s303 = scalar_lea.vmem [#allocation10], %s302
        // Predicated region
        $region45: #{tpu_custom_call.1} parent=27 // pred_check
          %p304 = pneg %p113
        $region46: #{tpu_custom_call.1} parent=27 // pred_check_branch
          %306 = sbr.rel (%p304) target = $region48
        $region47: #{tpu_custom_call.1} parent=27 // pred_region
          %s308 = ssub.s32 128, 128
          %309 = vsyncadd %s295, %s308
          %s310 = smul.addr %s31, 128
          %s311 = scalar_lea.hbm %s2, %s310
          %s313 = sshll.u32 %s298, 4
          %s314 = int_to_ptr.vmem [resolvable:$true] %s313
          %316 = dma.vmem_to_hbm [thread:$0]  %s314, 128, %s311, %s295
        $region48: #{tpu_custom_call.1} parent=27 // pred_fallthru
          _
        // Predicated region
        $region49: #{tpu_custom_call.1} parent=27 // pred_check
          %p317 = pneg %p139
        $region50: #{tpu_custom_call.1} parent=27 // pred_check_branch
          %319 = sbr.rel (%p317) target = $region52
        $region51: #{tpu_custom_call.1} parent=27 // pred_region
          %s321 = ssub.s32 128, 128
          %322 = vsyncadd %s300, %s321
          %s323 = smul.addr %s31, 128
          %s324 = scalar_lea.hbm %s3, %s323
          %s326 = sshll.u32 %s303, 4
          %s327 = int_to_ptr.vmem [resolvable:$true] %s326
          %329 = dma.vmem_to_hbm [thread:$0]  %s327, 128, %s324, %s300
        $region52: #{tpu_custom_call.1} parent=27 // pred_fallthru
          _
      $region28: #{tpu_custom_call.1} parent=5 // pred_fallthru
        _
      %p330 = scmp.le.s32.totalorder 2, %s22
      // Predicated region
      $region53: #{tpu_custom_call.1} parent=5 // pred_check
        %p331 = pneg %p330
      $region54: #{tpu_custom_call.1} parent=5 // pred_check_branch
        %333 = sbr.rel (%p331) target = $region56
      $region55: #{tpu_custom_call.1} parent=5 // pred_region
        %s334 = ssub.s32 %s22, 2
        // Predicated region
        $region57: #{tpu_custom_call.1} parent=55 // pred_check
          %p335 = pneg %p119
        $region58: #{tpu_custom_call.1} parent=55 // pred_check_branch
          %337 = sbr.rel (%p335) target = $region60
        $region59: #{tpu_custom_call.1} parent=55 // pred_region
          %s338 = sand.u32 %s104, 1
          %s339 = scalar_lea.sflag [#allocation6], %s338
          %s340 = sand.u32 %s104, 1
          %s341 = smul.addr %s340, 8
          %s342 = scalar_lea.vmem [#allocation9], %s341
          %343 = dma.done %s339, 128
        $region60: #{tpu_custom_call.1} parent=55 // pred_fallthru
          _
        // Predicated region
        $region61: #{tpu_custom_call.1} parent=55 // pred_check
          %p344 = pneg %p145
        $region62: #{tpu_custom_call.1} parent=55 // pred_check_branch
          %346 = sbr.rel (%p344) target = $region64
        $region63: #{tpu_custom_call.1} parent=55 // pred_region
          %s347 = sand.u32 %s130, 1
          %s348 = scalar_lea.sflag [#allocation11], %s347
          %s349 = sand.u32 %s130, 1
          %s350 = smul.addr %s349, 8
          %s351 = scalar_lea.vmem [#allocation10], %s350
          %352 = dma.done %s348, 128
        $region64: #{tpu_custom_call.1} parent=55 // pred_fallthru
          _
      $region56: #{tpu_custom_call.1} parent=5 // pred_fallthru
        _
    $region6: #{tpu_custom_call.1} parent=1 // loop_footer
      %s26 = sadd.s32 1, %s22
    $region7: #{tpu_custom_call.1} parent=1 // loop_footer_branch
      %21 = sbr.rel target = $region3
    $region8: #{tpu_custom_call.1} parent=1 // loop_exit
      _
    %353 = vsyncpa [#allocation5], 1
    %s354 = scalar_lea.sflag [#allocation5], 1
    %355 = vsyncpa %s354, 1
    %356 = vsyncpa [#allocation8], 1
    %s357 = scalar_lea.sflag [#allocation8], 1
    %358 = vsyncpa %s357, 1
    %359 = vsyncpa [#allocation6], 1
    %s360 = scalar_lea.sflag [#allocation6], 1
    %361 = vsyncpa %s360, 1
    %362 = vsyncpa [#allocation11], 1
    %s363 = scalar_lea.sflag [#allocation11], 1
    %364 = vsyncpa %s363, 1

</llo_original>
